<compile_context>
chip_gen: v7x
topology: tpu7x:2x2x1
jax: 0.10.0
libtpu: 0.0.40
codegen_flags: <defaults>
</compile_context>

<pallas_src>
import math

import jax
import jax.numpy as jnp
from jax import lax
from jax.experimental import pallas as pl
from jax.experimental.pallas import tpu as pltpu

INPUT_DIM = 2
HIDDEN_DIM = 128
OUTPUT_DIM = 2
NEG_SLOPE = 0.01          # PyTorch nn.LeakyReLU() default

RAW_IN = INPUT_DIM + 1 + 1   # 4 = [y, t, class_condition]
PAD_IN = 16                  # zero-padded input feature width -> full (16,128) bf16 W1 tile
OUT_ROWS = 8                 # zero-padded output rows of the transposed (OUT_ROWS, B) output
MAX_TM = 2048                # max batch-tile rows


def _leaky_relu(x):
    # max(x, slope*x) == LeakyReLU(x) for 0 < slope < 1; 2 VALU ops instead of 3.
    return jnp.maximum(x, NEG_SLOPE * x)


def _round_up(n, m):
    return ((n + m - 1) // m) * m


def _choose_tm(batch):
    """Pick the batch-tile size (rows).  All returns are multiples of 8; multi-step
    tiles are multiples of 128 so the transposed output block stays lane-aligned."""
    b8 = _round_up(batch, 8)
    if b8 <= MAX_TM:
        # Single tile covers everything; split into two lane-aligned tiles when there
        # is enough work so the "parallel" axis can shard across v7x's two TensorCores.
        if b8 >= 1024 and b8 % 256 == 0:
            return b8 // 2
        return b8
    # Large batch: biggest lane-aligned tile keeping padding waste <= ~12.5%.
    for tm in (2048, 1024, 512, 384, 256, 128):
        if tm > MAX_TM:
            continue
        padded = _round_up(b8, tm)
        if padded - b8 <= b8 // 8:
            return tm
    return 128


def flow_mlp_kernel(x_ref,
                    w1, b1, w2, b2, w3, b3, w4, b4, w5, b5, w6, b6,
                    out_ref):
    """One batch tile: 5 hidden layers (bf16 MXU, f32 accumulate, f32 bias+LeakyReLU,
    re-cast to bf16) + a final layer emitted transposed (features on sublanes, batch
    on lanes) for a lane-dense, 16x smaller output writeback."""

    def hidden_layer(h, w, b):
        z = jnp.dot(h, w[...], preferred_element_type=jnp.float32) + b[...]
        return _leaky_relu(z).astype(jnp.bfloat16)

    h = x_ref[...]                        # [tm, PAD_IN] bf16
    h = hidden_layer(h, w1, b1)
    h = hidden_layer(h, w2, b2)
    h = hidden_layer(h, w3, b3)
    h = hidden_layer(h, w4, b4)
    h = hidden_layer(h, w5, b5)

    # out_t[f, n] = sum_k W6[f, k] * h[n, k]   (trans_b dot -> [OUT_ROWS, tm])
    out_t = lax.dot_general(
        w6[...], h,
        dimension_numbers=(((1,), (1,)), ((), ())),
        preferred_element_type=jnp.float32)
    out_ref[...] = out_t + b6[...]        # b6 is [OUT_ROWS, 1], broadcast over lanes


def init_params(key):
    """f32 params matching nn.Linear default init U(-1/sqrt(fan_in), 1/sqrt(fan_in)).
    Weights stored [in, out] so the reference computes x @ W + b."""
    dims = [(RAW_IN, HIDDEN_DIM)] + [(HIDDEN_DIM, HIDDEN_DIM)] * 4 \
           + [(HIDDEN_DIM, OUTPUT_DIM)]
    params = []
    for fan_in, fan_out in dims:
        key, kw, kb = jax.random.split(key, 3)
        bound = 1.0 / math.sqrt(float(fan_in))
        w = jax.random.uniform(kw, (fan_in, fan_out), jnp.float32, -bound, bound)
        b = jax.random.uniform(kb, (1, fan_out), jnp.float32, -bound, bound)
        params.append((w, b))
    return params


def pad_params_for_kernel(params):
    """Zero-pad W1 rows (4 -> PAD_IN); store the final layer transposed
    ([OUT_ROWS, HIDDEN] weight, [OUT_ROWS, 1] bias) zero-padded to OUT_ROWS.
    Weights cast to bf16, biases kept f32."""
    flat = []
    last = len(params) - 1
    for i, (w, b) in enumerate(params):
        if i == 0:
            w = jnp.pad(w, ((0, PAD_IN - w.shape[0]), (0, 0)))
        if i == last:
            n_out = w.shape[1]
            w = jnp.pad(w.T, ((0, OUT_ROWS - n_out), (0, 0)))          # [OUT_ROWS, HIDDEN]
            b = jnp.pad(b.reshape(-1, 1), ((0, OUT_ROWS - n_out), (0, 0)))  # [OUT_ROWS, 1]
        flat.append(w.astype(jnp.bfloat16))
        flat.append(b.astype(jnp.float32))
    return tuple(flat)


@jax.jit
def flow_matching_forward(y, t, class_condition, kernel_params_flat):
    # Glue (concat + tiny feature-dim pad + bf16 cast) kept in plain JAX.
    x = jnp.concatenate([y, t, class_condition], axis=1).astype(jnp.bfloat16)
    batch = x.shape[0]
    x = jnp.pad(x, ((0, 0), (0, PAD_IN - RAW_IN)))      # zero cols match zero rows in W1

    tm = _choose_tm(batch)
    padded_b = _round_up(batch, tm)
    if padded_b != batch:
        x = jnp.pad(x, ((0, padded_b - batch), (0, 0)))
    grid = (padded_b // tm,)

    # Activation tile is blocked over the batch; every weight/bias uses a constant
    # index_map so it is DMA'd once and stays VMEM-resident across grid steps.
    def const_spec(shape):
        return pl.BlockSpec(shape, lambda i: (0, 0))

    in_specs = [pl.BlockSpec((tm, PAD_IN), lambda i: (i, 0))]
    in_specs += [const_spec(p.shape) for p in kernel_params_flat]
    out_specs = pl.BlockSpec((OUT_ROWS, tm), lambda i: (0, i))

    flops = 2 * padded_b * HIDDEN_DIM * (PAD_IN + 4 * HIDDEN_DIM + OUT_ROWS)
    bytes_accessed = (x.size * x.dtype.itemsize
                      + OUT_ROWS * padded_b * 4
                      + sum(int(p.size) * p.dtype.itemsize for p in kernel_params_flat))
    cost = pl.CostEstimate(flops=flops, transcendentals=0,
                           bytes_accessed=bytes_accessed)

    out_t = pl.pallas_call(
        flow_mlp_kernel,
        out_shape=jax.ShapeDtypeStruct((OUT_ROWS, padded_b), jnp.float32),
        grid=grid,
        in_specs=in_specs,
        out_specs=out_specs,
        compiler_params=pltpu.CompilerParams(
            dimension_semantics=("parallel",),
            vmem_limit_bytes=32 * 1024 * 1024),
        cost_estimate=cost,
    )(x, *kernel_params_flat)

    # Transposed, padded output -> [batch, OUTPUT_DIM]
    return out_t[:OUTPUT_DIM, :batch].T


def reference_forward(y, t, class_condition, params):
    """Pure-JAX reference mirroring the kernel's precision path
    (bf16 inputs/weights, f32 accumulation, bf16 activations between layers)."""
    x = jnp.concatenate([y, t, class_condition], axis=1).astype(jnp.bfloat16)
    h = x
    for i, (w, b) in enumerate(params):
        z = jnp.dot(h, w.astype(jnp.bfloat16),
                    preferred_element_type=jnp.float32) + b
        if i < len(params) - 1:
            h = _leaky_relu(z).astype(jnp.bfloat16)
        else:
            h = z
    return h


if __name__ == "__main__":
    key = jax.random.PRNGKey(0)
    k_param, k_data = jax.random.split(key)

    params = init_params(k_param)
    kernel_params_flat = pad_params_for_kernel(params)

    # batch=8   : small single-tile path (primary example)
    # batch=1024: two-tile megacore split path
    # batch=2056: multi-step lane-aligned grid path with batch-pad slice
    for batch in (8, 1024, 2056):
        kb = jax.random.fold_in(k_data, batch)
        k_y, k_t, k_c = jax.random.split(kb, 3)
        y = jax.random.normal(k_y, (batch, INPUT_DIM), jnp.float32)
        t = jax.random.uniform(k_t, (batch, 1), jnp.float32)
        # class_condition is concatenated directly in forward(), so it is a [B, 1] float column.
        class_condition = jax.random.randint(k_c, (batch, 1), 0, 5).astype(jnp.float32)

        out = flow_matching_forward(y, t, class_condition, kernel_params_flat)
        out = jax.block_until_ready(out)
        assert out.shape == (batch, OUTPUT_DIM)

        ref = reference_forward(y, t, class_condition, params)
        assert jnp.allclose(out, ref, atol=1e-3, rtol=1e-3), f"mismatch at batch={batch}"

    print("KERNEL_OK")
</pallas_src>

<mosaic_0001>
module attributes {stable_mosaic.version = 11 : i64} {
  func.func @flow_mlp_kernel(%arg0: i32, %arg1: memref<8x16xbf16, #tpu.memory_space<vmem>>, %arg2: memref<16x128xbf16, #tpu.memory_space<vmem>>, %arg3: memref<1x128xf32, #tpu.memory_space<vmem>>, %arg4: memref<128x128xbf16, #tpu.memory_space<vmem>>, %arg5: memref<1x128xf32, #tpu.memory_space<vmem>>, %arg6: memref<128x128xbf16, #tpu.memory_space<vmem>>, %arg7: memref<1x128xf32, #tpu.memory_space<vmem>>, %arg8: memref<128x128xbf16, #tpu.memory_space<vmem>>, %arg9: memref<1x128xf32, #tpu.memory_space<vmem>>, %arg10: memref<128x128xbf16, #tpu.memory_space<vmem>>, %arg11: memref<1x128xf32, #tpu.memory_space<vmem>>, %arg12: memref<8x128xbf16, #tpu.memory_space<vmem>>, %arg13: memref<8x1xf32, #tpu.memory_space<vmem>>, %arg14: memref<8x8xf32, #tpu.memory_space<vmem>>) attributes {dimension_semantics = [#tpu.dimension_semantics<parallel>], iteration_bounds = array<i64: 1>, scalar_prefetch = 0 : i64, scratch_operands = 0 : i64, tpu.core_type = #tpu.core_type<tc>, window_params = [{transform_indices = @transform_0, window_bounds = array<i64: 8, 16>}, {pipeline_mode = #tpu.pipeline_mode<synchronous>, transform_indices = @transform_1, window_bounds = array<i64: 16, 128>}, {pipeline_mode = #tpu.pipeline_mode<synchronous>, transform_indices = @transform_2, window_bounds = array<i64: 1, 128>}, {pipeline_mode = #tpu.pipeline_mode<synchronous>, transform_indices = @transform_3, window_bounds = array<i64: 128, 128>}, {pipeline_mode = #tpu.pipeline_mode<synchronous>, transform_indices = @transform_4, window_bounds = array<i64: 1, 128>}, {pipeline_mode = #tpu.pipeline_mode<synchronous>, transform_indices = @transform_5, window_bounds = array<i64: 128, 128>}, {pipeline_mode = #tpu.pipeline_mode<synchronous>, transform_indices = @transform_6, window_bounds = array<i64: 1, 128>}, {pipeline_mode = #tpu.pipeline_mode<synchronous>, transform_indices = @transform_7, window_bounds = array<i64: 128, 128>}, {pipeline_mode = #tpu.pipeline_mode<synchronous>, transform_indices = @transform_8, window_bounds = array<i64: 1, 128>}, {pipeline_mode = #tpu.pipeline_mode<synchronous>, transform_indices = @transform_9, window_bounds = array<i64: 128, 128>}, {pipeline_mode = #tpu.pipeline_mode<synchronous>, transform_indices = @transform_10, window_bounds = array<i64: 1, 128>}, {pipeline_mode = #tpu.pipeline_mode<synchronous>, transform_indices = @transform_11, window_bounds = array<i64: 8, 128>}, {pipeline_mode = #tpu.pipeline_mode<synchronous>, transform_indices = @transform_12, window_bounds = array<i64: 8, 1>}, {transform_indices = @transform_13, window_bounds = array<i64: 8, 8>}]} {
    %c0 = arith.constant 0 : index
    %c0_0 = arith.constant 0 : index
    %0 = vector.load %arg1[%c0, %c0_0] : memref<8x16xbf16, #tpu.memory_space<vmem>>, vector<8x16xbf16>
    %c0_1 = arith.constant 0 : index
    %c0_2 = arith.constant 0 : index
    %1 = vector.load %arg2[%c0_1, %c0_2] : memref<16x128xbf16, #tpu.memory_space<vmem>>, vector<16x128xbf16>
    %cst = arith.constant dense<0.000000e+00> : vector<8x128xf32>
    %2 = tpu.matmul %0, %1, %cst {dimension_numbers = #tpu.dot_dimension_numbers<[1], [0], [0], [1], [0, 0, 1, 1], [], []>} : vector<8x16xbf16>, vector<16x128xbf16>, vector<8x128xf32> -> vector<8x128xf32>
    %c0_3 = arith.constant 0 : index
    %c0_4 = arith.constant 0 : index
    %3 = vector.load %arg3[%c0_3, %c0_4] : memref<1x128xf32, #tpu.memory_space<vmem>>, vector<1x128xf32>
    %4 = vector.broadcast %3 : vector<1x128xf32> to vector<8x128xf32>
    %5 = arith.addf %2, %4 : vector<8x128xf32>
    %cst_5 = arith.constant 0.00999999977 : f32
    %6 = vector.broadcast %cst_5 : f32 to vector<8x128xf32>
    %7 = arith.mulf %6, %5 : vector<8x128xf32>
    %8 = arith.maximumf %5, %7 : vector<8x128xf32>
    %9 = arith.truncf %8 : vector<8x128xf32> to vector<8x128xbf16>
    %c0_6 = arith.constant 0 : index
    %c0_7 = arith.constant 0 : index
    %10 = vector.load %arg4[%c0_6, %c0_7] : memref<128x128xbf16, #tpu.memory_space<vmem>>, vector<128x128xbf16>
    %cst_8 = arith.constant dense<0.000000e+00> : vector<8x128xf32>
    %11 = tpu.matmul %9, %10, %cst_8 {dimension_numbers = #tpu.dot_dimension_numbers<[1], [0], [0], [1], [0, 0, 1, 1], [], []>} : vector<8x128xbf16>, vector<128x128xbf16>, vector<8x128xf32> -> vector<8x128xf32>
    %c0_9 = arith.constant 0 : index
    %c0_10 = arith.constant 0 : index
    %12 = vector.load %arg5[%c0_9, %c0_10] : memref<1x128xf32, #tpu.memory_space<vmem>>, vector<1x128xf32>
    %13 = vector.broadcast %12 : vector<1x128xf32> to vector<8x128xf32>
    %14 = arith.addf %11, %13 : vector<8x128xf32>
    %cst_11 = arith.constant 0.00999999977 : f32
    %15 = vector.broadcast %cst_11 : f32 to vector<8x128xf32>
    %16 = arith.mulf %15, %14 : vector<8x128xf32>
    %17 = arith.maximumf %14, %16 : vector<8x128xf32>
    %18 = arith.truncf %17 : vector<8x128xf32> to vector<8x128xbf16>
    %c0_12 = arith.constant 0 : index
    %c0_13 = arith.constant 0 : index
    %19 = vector.load %arg6[%c0_12, %c0_13] : memref<128x128xbf16, #tpu.memory_space<vmem>>, vector<128x128xbf16>
    %cst_14 = arith.constant dense<0.000000e+00> : vector<8x128xf32>
    %20 = tpu.matmul %18, %19, %cst_14 {dimension_numbers = #tpu.dot_dimension_numbers<[1], [0], [0], [1], [0, 0, 1, 1], [], []>} : vector<8x128xbf16>, vector<128x128xbf16>, vector<8x128xf32> -> vector<8x128xf32>
    %c0_15 = arith.constant 0 : index
    %c0_16 = arith.constant 0 : index
    %21 = vector.load %arg7[%c0_15, %c0_16] : memref<1x128xf32, #tpu.memory_space<vmem>>, vector<1x128xf32>
    %22 = vector.broadcast %21 : vector<1x128xf32> to vector<8x128xf32>
    %23 = arith.addf %20, %22 : vector<8x128xf32>
    %cst_17 = arith.constant 0.00999999977 : f32
    %24 = vector.broadcast %cst_17 : f32 to vector<8x128xf32>
    %25 = arith.mulf %24, %23 : vector<8x128xf32>
    %26 = arith.maximumf %23, %25 : vector<8x128xf32>
    %27 = arith.truncf %26 : vector<8x128xf32> to vector<8x128xbf16>
    %c0_18 = arith.constant 0 : index
    %c0_19 = arith.constant 0 : index
    %28 = vector.load %arg8[%c0_18, %c0_19] : memref<128x128xbf16, #tpu.memory_space<vmem>>, vector<128x128xbf16>
    %cst_20 = arith.constant dense<0.000000e+00> : vector<8x128xf32>
    %29 = tpu.matmul %27, %28, %cst_20 {dimension_numbers = #tpu.dot_dimension_numbers<[1], [0], [0], [1], [0, 0, 1, 1], [], []>} : vector<8x128xbf16>, vector<128x128xbf16>, vector<8x128xf32> -> vector<8x128xf32>
    %c0_21 = arith.constant 0 : index
    %c0_22 = arith.constant 0 : index
    %30 = vector.load %arg9[%c0_21, %c0_22] : memref<1x128xf32, #tpu.memory_space<vmem>>, vector<1x128xf32>
    %31 = vector.broadcast %30 : vector<1x128xf32> to vector<8x128xf32>
    %32 = arith.addf %29, %31 : vector<8x128xf32>
    %cst_23 = arith.constant 0.00999999977 : f32
    %33 = vector.broadcast %cst_23 : f32 to vector<8x128xf32>
    %34 = arith.mulf %33, %32 : vector<8x128xf32>
    %35 = arith.maximumf %32, %34 : vector<8x128xf32>
    %36 = arith.truncf %35 : vector<8x128xf32> to vector<8x128xbf16>
    %c0_24 = arith.constant 0 : index
    %c0_25 = arith.constant 0 : index
    %37 = vector.load %arg10[%c0_24, %c0_25] : memref<128x128xbf16, #tpu.memory_space<vmem>>, vector<128x128xbf16>
    %cst_26 = arith.constant dense<0.000000e+00> : vector<8x128xf32>
    %38 = tpu.matmul %36, %37, %cst_26 {dimension_numbers = #tpu.dot_dimension_numbers<[1], [0], [0], [1], [0, 0, 1, 1], [], []>} : vector<8x128xbf16>, vector<128x128xbf16>, vector<8x128xf32> -> vector<8x128xf32>
    %c0_27 = arith.constant 0 : index
    %c0_28 = arith.constant 0 : index
    %39 = vector.load %arg11[%c0_27, %c0_28] : memref<1x128xf32, #tpu.memory_space<vmem>>, vector<1x128xf32>
    %40 = vector.broadcast %39 : vector<1x128xf32> to vector<8x128xf32>
    %41 = arith.addf %38, %40 : vector<8x128xf32>
    %cst_29 = arith.constant 0.00999999977 : f32
    %42 = vector.broadcast %cst_29 : f32 to vector<8x128xf32>
    %43 = arith.mulf %42, %41 : vector<8x128xf32>
    %44 = arith.maximumf %41, %43 : vector<8x128xf32>
    %45 = arith.truncf %44 : vector<8x128xf32> to vector<8x128xbf16>
    %c0_30 = arith.constant 0 : index
    %c0_31 = arith.constant 0 : index
    %46 = vector.load %arg12[%c0_30, %c0_31] : memref<8x128xbf16, #tpu.memory_space<vmem>>, vector<8x128xbf16>
    %cst_32 = arith.constant dense<0.000000e+00> : vector<8x8xf32>
    %47 = tpu.matmul %46, %45, %cst_32 {dimension_numbers = #tpu.dot_dimension_numbers<[1], [1], [0], [0], [0, 0, 1, 0], [], []>} : vector<8x128xbf16>, vector<8x128xbf16>, vector<8x8xf32> -> vector<8x8xf32>
    %c0_33 = arith.constant 0 : index
    %c0_34 = arith.constant 0 : index
    %48 = vector.load %arg13[%c0_33, %c0_34] : memref<8x1xf32, #tpu.memory_space<vmem>>, vector<8x1xf32>
    %49 = vector.broadcast %48 : vector<8x1xf32> to vector<8x8xf32>
    %50 = arith.addf %47, %49 : vector<8x8xf32>
    %c0_35 = arith.constant 0 : index
    %c0_36 = arith.constant 0 : index
    %51 = vector.load %arg14[%c0_35, %c0_36] : memref<8x8xf32, #tpu.memory_space<vmem>>, vector<8x8xf32>
    tpu.vector_store %arg14[%c0_35, %c0_36], %50 {strides = array<i32>} : memref<8x8xf32, #tpu.memory_space<vmem>>, vector<8x8xf32>,
    return
  }
  func.func @transform_0(%arg0: i32) -> (i32, i32) {
    %c0_i32 = arith.constant 0 : i32
    %c0_i32_0 = arith.constant 0 : i32
    return %arg0, %c0_i32 : i32, i32
  }
  func.func @transform_1(%arg0: i32) -> (i32, i32) {
    %c0_i32 = arith.constant 0 : i32
    %c0_i32_0 = arith.constant 0 : i32
    %c0_i32_1 = arith.constant 0 : i32
    return %c0_i32, %c0_i32_0 : i32, i32
  }
  func.func @transform_2(%arg0: i32) -> (i32, i32) {
    %c0_i32 = arith.constant 0 : i32
    %c0_i32_0 = arith.constant 0 : i32
    %c0_i32_1 = arith.constant 0 : i32
    return %c0_i32, %c0_i32_0 : i32, i32
  }
  func.func @transform_3(%arg0: i32) -> (i32, i32) {
    %c0_i32 = arith.constant 0 : i32
    %c0_i32_0 = arith.constant 0 : i32
    %c0_i32_1 = arith.constant 0 : i32
    return %c0_i32, %c0_i32_0 : i32, i32
  }
  func.func @transform_4(%arg0: i32) -> (i32, i32) {
    %c0_i32 = arith.constant 0 : i32
    %c0_i32_0 = arith.constant 0 : i32
    %c0_i32_1 = arith.constant 0 : i32
    return %c0_i32, %c0_i32_0 : i32, i32
  }
  func.func @transform_5(%arg0: i32) -> (i32, i32) {
    %c0_i32 = arith.constant 0 : i32
    %c0_i32_0 = arith.constant 0 : i32
    %c0_i32_1 = arith.constant 0 : i32
    return %c0_i32, %c0_i32_0 : i32, i32
  }
  func.func @transform_6(%arg0: i32) -> (i32, i32) {
    %c0_i32 = arith.constant 0 : i32
    %c0_i32_0 = arith.constant 0 : i32
    %c0_i32_1 = arith.constant 0 : i32
    return %c0_i32, %c0_i32_0 : i32, i32
  }
  func.func @transform_7(%arg0: i32) -> (i32, i32) {
    %c0_i32 = arith.constant 0 : i32
    %c0_i32_0 = arith.constant 0 : i32
    %c0_i32_1 = arith.constant 0 : i32
    return %c0_i32, %c0_i32_0 : i32, i32
  }
  func.func @transform_8(%arg0: i32) -> (i32, i32) {
    %c0_i32 = arith.constant 0 : i32
    %c0_i32_0 = arith.constant 0 : i32
    %c0_i32_1 = arith.constant 0 : i32
    return %c0_i32, %c0_i32_0 : i32, i32
  }
  func.func @transform_9(%arg0: i32) -> (i32, i32) {
    %c0_i32 = arith.constant 0 : i32
    %c0_i32_0 = arith.constant 0 : i32
    %c0_i32_1 = arith.constant 0 : i32
    return %c0_i32, %c0_i32_0 : i32, i32
  }
  func.func @transform_10(%arg0: i32) -> (i32, i32) {
    %c0_i32 = arith.constant 0 : i32
    %c0_i32_0 = arith.constant 0 : i32
    %c0_i32_1 = arith.constant 0 : i32
    return %c0_i32, %c0_i32_0 : i32, i32
  }
  func.func @transform_11(%arg0: i32) -> (i32, i32) {
    %c0_i32 = arith.constant 0 : i32
    %c0_i32_0 = arith.constant 0 : i32
    %c0_i32_1 = arith.constant 0 : i32
    return %c0_i32, %c0_i32_0 : i32, i32
  }
  func.func @transform_12(%arg0: i32) -> (i32, i32) {
    %c0_i32 = arith.constant 0 : i32
    %c0_i32_0 = arith.constant 0 : i32
    %c0_i32_1 = arith.constant 0 : i32
    return %c0_i32, %c0_i32_0 : i32, i32
  }
  func.func @transform_13(%arg0: i32) -> (i32, i32) {
    %c0_i32 = arith.constant 0 : i32
    %c0_i32_0 = arith.constant 0 : i32
    return %c0_i32, %arg0 : i32, i32
  }
}

</mosaic_0001>

<llo_original>
// kernel: flow_matching_forward.1
$region0: #{flow_matching_forward.1}
  #allocation0 [shape = 'u32[]', space=smem, size = 0x4, offset = 0x4, fixed_abs, tag = 'smem constant byte address 0x4 - core index']
  #allocation1 [shape = 'u32[144,128]{1,0:T(1,128)}', space=vmem, size = 0x12000, scoped, tag = 'internal scratch']
  %s0 = inlined_call_operand.vmem [shape: bf16[8,16], index: 0, kind: input, shape index: {}]
  %s1 = inlined_call_operand.hbm [shape: bf16[16,128], index: 1, kind: input, shape index: {}]
  %s2 = inlined_call_operand.vmem [shape: f32[1,128], index: 2, kind: input, shape index: {}]
  %s3 = inlined_call_operand.vmem [shape: bf16[128,128], index: 3, kind: input, shape index: {}]
  %s4 = inlined_call_operand.vmem [shape: f32[1,128], index: 4, kind: input, shape index: {}]
  %s5 = inlined_call_operand.hbm [shape: bf16[128,128], index: 5, kind: input, shape index: {}]
  %s6 = inlined_call_operand.vmem [shape: f32[1,128], index: 6, kind: input, shape index: {}]
  %s7 = inlined_call_operand.hbm [shape: bf16[128,128], index: 7, kind: input, shape index: {}]
  %s8 = inlined_call_operand.vmem [shape: f32[1,128], index: 8, kind: input, shape index: {}]
  %s9 = inlined_call_operand.hbm [shape: bf16[128,128], index: 9, kind: input, shape index: {}]
  %s10 = inlined_call_operand.vmem [shape: f32[1,128], index: 10, kind: input, shape index: {}]
  %s11 = inlined_call_operand.vmem [shape: bf16[8,128], index: 11, kind: input, shape index: {}]
  %s12 = inlined_call_operand.vmem [shape: f32[8,1], index: 12, kind: input, shape index: {}]
  %s13 = inlined_call_operand.vmem [shape: f32[8,8], index: 13, kind: output, shape index: {}]
  %s14 = sld [smem:[#allocation0]]
  $region78: #{flow_matching_forward.1} parent=0
    _
  %s16 = ssub.s32 1, %s14
  %s17 = scalar_select 0, %s16, %s14
  $region1: #{flow_matching_forward.1} parent=0
    #allocation2 [shape = 'u8[4096]{0}', space=vmem, size = 0x1000, scoped, tag = 'input window, operand 1, single buffered']
    #allocation3 [shape = 's32[1]{0}', space=sflag, size = 0x4, scoped, tag = 'scoped memory for flow_matching_forward.1']
    #allocation4 [shape = 'u8[32768]{0}', space=vmem, size = 0x8000, scoped, tag = 'input window, operand 5, single buffered']
    #allocation5 [shape = 's32[1]{0}', space=sflag, size = 0x4, scoped, tag = 'scoped memory for flow_matching_forward.1']
    #allocation6 [shape = 'u8[32768]{0}', space=vmem, size = 0x8000, scoped, tag = 'input window, operand 7, single buffered']
    #allocation7 [shape = 'u8[32768]{0}', space=vmem, size = 0x8000, scoped, tag = 'input window, operand 9, single buffered']
    #allocation8 [shape = 's32[1]{0}', space=sflag, size = 0x4, scoped, tag = 'scoped memory for flow_matching_forward.1']
    %18 = vsyncpa [#allocation3], 0
    %19 = vsyncpa [#allocation5], 0
    %20 = vsyncpa [#allocation8], 0
    // Predicated region
    $region2: #{flow_matching_forward.1} parent=1 // pred_check
      _
    $region3: #{flow_matching_forward.1} parent=1 // pred_check_branch
      %22 = sbr.rel (0) target = $region5
    $region4: #{flow_matching_forward.1} parent=1 // pred_region
      _
    $region5: #{flow_matching_forward.1} parent=1 // pred_fallthru
      _
    // Predicated region
    $region6: #{flow_matching_forward.1} parent=1 // pred_check
      _
    $region7: #{flow_matching_forward.1} parent=1 // pred_check_branch
      %24 = sbr.rel (0) target = $region9
    $region8: #{flow_matching_forward.1} parent=1 // pred_region
      %s26 = ssub.s32 128, 128
      %27 = vsyncadd [#allocation3], %s26
      %s28 = sshll.u32 [#allocation2], 4
      %s29 = int_to_ptr.vmem [resolvable:$true] %s28
      %34 = dma.hbm_to_vmem [thread:$0]  %s1, 128, %s29, [#allocation3], 64, 64, 4
    $region9: #{flow_matching_forward.1} parent=1 // pred_fallthru
      _
    // Predicated region
    $region10: #{flow_matching_forward.1} parent=1 // pred_check
      _
    $region11: #{flow_matching_forward.1} parent=1 // pred_check_branch
      %36 = sbr.rel (0) target = $region13
    $region12: #{flow_matching_forward.1} parent=1 // pred_region
      _
    $region13: #{flow_matching_forward.1} parent=1 // pred_fallthru
      _
    // Predicated region
    $region14: #{flow_matching_forward.1} parent=1 // pred_check
      _
    $region15: #{flow_matching_forward.1} parent=1 // pred_check_branch
      %38 = sbr.rel (0) target = $region17
    $region16: #{flow_matching_forward.1} parent=1 // pred_region
      _
    $region17: #{flow_matching_forward.1} parent=1 // pred_fallthru
      _
    // Predicated region
    $region18: #{flow_matching_forward.1} parent=1 // pred_check
      _
    $region19: #{flow_matching_forward.1} parent=1 // pred_check_branch
      %40 = sbr.rel (0) target = $region21
    $region20: #{flow_matching_forward.1} parent=1 // pred_region
      _
    $region21: #{flow_matching_forward.1} parent=1 // pred_fallthru
      _
    // Predicated region
    $region22: #{flow_matching_forward.1} parent=1 // pred_check
      _
    $region23: #{flow_matching_forward.1} parent=1 // pred_check_branch
      %42 = sbr.rel (0) target = $region25
    $region24: #{flow_matching_forward.1} parent=1 // pred_region
      %s44 = ssub.s32 1024, 1024
      %45 = vsyncadd [#allocation5], %s44
      %s46 = sshll.u32 [#allocation4], 4
      %s47 = int_to_ptr.vmem [resolvable:$true] %s46
      %52 = dma.hbm_to_vmem [thread:$0]  %s5, 1024, %s47, [#allocation5], 64, 64, 4
    $region25: #{flow_matching_forward.1} parent=1 // pred_fallthru
      _
    // Predicated region
    $region26: #{flow_matching_forward.1} parent=1 // pred_check
      _
    $region27: #{flow_matching_forward.1} parent=1 // pred_check_branch
      %54 = sbr.rel (0) target = $region29
    $region28: #{flow_matching_forward.1} parent=1 // pred_region
      _
    $region29: #{flow_matching_forward.1} parent=1 // pred_fallthru
      _
    // Predicated region
    $region30: #{flow_matching_forward.1} parent=1 // pred_check
      _
    $region31: #{flow_matching_forward.1} parent=1 // pred_check_branch
      %56 = sbr.rel (0) target = $region33
    $region32: #{flow_matching_forward.1} parent=1 // pred_region
      %s58 = ssub.s32 1024, 1024
      %59 = vsyncadd [#allocation5], %s58
      %s60 = sshll.u32 [#allocation6], 4
      %s61 = int_to_ptr.vmem [resolvable:$true] %s60
      %66 = dma.hbm_to_vmem [thread:$0]  %s7, 1024, %s61, [#allocation5], 64, 64, 4
    $region33: #{flow_matching_forward.1} parent=1 // pred_fallthru
      _
    // Predicated region
    $region34: #{flow_matching_forward.1} parent=1 // pred_check
      _
    $region35: #{flow_matching_forward.1} parent=1 // pred_check_branch
      %68 = sbr.rel (0) target = $region37
    $region36: #{flow_matching_forward.1} parent=1 // pred_region
      _
    $region37: #{flow_matching_forward.1} parent=1 // pred_fallthru
      _
    // Predicated region
    $region38: #{flow_matching_forward.1} parent=1 // pred_check
      _
    $region39: #{flow_matching_forward.1} parent=1 // pred_check_branch
      %70 = sbr.rel (0) target = $region41
    $region40: #{flow_matching_forward.1} parent=1 // pred_region
      %s72 = ssub.s32 1024, 1024
      %73 = vsyncadd [#allocation8], %s72
      %s74 = sshll.u32 [#allocation7], 4
      %s75 = int_to_ptr.vmem [resolvable:$true] %s74
      %80 = dma.hbm_to_vmem [thread:$0]  %s9, 1024, %s75, [#allocation8], 64, 64, 4
    $region41: #{flow_matching_forward.1} parent=1 // pred_fallthru
      _
    // Predicated region
    $region42: #{flow_matching_forward.1} parent=1 // pred_check
      _
    $region43: #{flow_matching_forward.1} parent=1 // pred_check_branch
      %82 = sbr.rel (0) target = $region45
    $region44: #{flow_matching_forward.1} parent=1 // pred_region
      _
    $region45: #{flow_matching_forward.1} parent=1 // pred_fallthru
      _
    // Predicated region
    $region46: #{flow_matching_forward.1} parent=1 // pred_check
      _
    $region47: #{flow_matching_forward.1} parent=1 // pred_check_branch
      %84 = sbr.rel (0) target = $region49
    $region48: #{flow_matching_forward.1} parent=1 // pred_region
      _
    $region49: #{flow_matching_forward.1} parent=1 // pred_fallthru
      _
    // Predicated region
    $region50: #{flow_matching_forward.1} parent=1 // pred_check
      _
    $region51: #{flow_matching_forward.1} parent=1 // pred_check_branch
      %86 = sbr.rel (0) target = $region53
    $region52: #{flow_matching_forward.1} parent=1 // pred_region
      _
    $region53: #{flow_matching_forward.1} parent=1 // pred_fallthru
      _
    // Predicated region
    $region54: #{flow_matching_forward.1} parent=1 // pred_check
      _
    $region55: #{flow_matching_forward.1} parent=1 // pred_check_branch
      %88 = sbr.rel (0) target = $region57
    $region56: #{flow_matching_forward.1} parent=1 // pred_region
      %89 = dma.done [#allocation3], 128
    $region57: #{flow_matching_forward.1} parent=1 // pred_fallthru
      _
    // Predicated region
    $region58: #{flow_matching_forward.1} parent=1 // pred_check
      _
    $region59: #{flow_matching_forward.1} parent=1 // pred_check_branch
      %91 = sbr.rel (0) target = $region61
    $region60: #{flow_matching_forward.1} parent=1 // pred_region
      %92 = dma.done [#allocation5], 1024
    $region61: #{flow_matching_forward.1} parent=1 // pred_fallthru
      _
    // Predicated region
    $region62: #{flow_matching_forward.1} parent=1 // pred_check
      _
    $region63: #{flow_matching_forward.1} parent=1 // pred_check_branch
      %94 = sbr.rel (0) target = $region65
    $region64: #{flow_matching_forward.1} parent=1 // pred_region
      %95 = dma.done [#allocation5], 1024
    $region65: #{flow_matching_forward.1} parent=1 // pred_fallthru
      _
    // Predicated region
    $region66: #{flow_matching_forward.1} parent=1 // pred_check
      _
    $region67: #{flow_matching_forward.1} parent=1 // pred_check_branch
      %97 = sbr.rel (0) target = $region69
    $region68: #{flow_matching_forward.1} parent=1 // pred_region
      %98 = dma.done [#allocation8], 1024
    $region69: #{flow_matching_forward.1} parent=1 // pred_fallthru
      _
    %v100 = vld [vmem:[%s0] sm:$0xf]
    %v101 = vld [vmem:[#allocation2] sm:$0xf]
    %v102 = vld [vmem:[#allocation2 + $0x4] sm:$0xf]
    %v103 = vld [vmem:[%s2] sm:$0x1]
    %v105 = vlaneseq
    %v106 = vshrl.u32 %v105, 7
    %v107 = vsub.s32 0, %v106
    %v108 = vrot.slane %v103, %v107
    %v112 = vunpack.c.l.b16 %v101
    %v113 = vunpack.c.l.b16 %v102
    %v114 = vpack.c.b16 %v113, %v112
    %vm116 = vcmask 130048
    %v118 = vsel %vm116, %v100, 0
    %120 = vmatprep.subr.bf16.mxu0 0
    %121 = vmatpush1.bf16.msra.mxu0 %v114
    %122 = vmatprep.subr.bf16.mxu0 0
    %123 = vmatpush1.bf16.msra.mxu0 0
    %124 = vmatprep.subr.bf16.mxu0 0
    %125 = vmatpush1.bf16.msra.mxu0 0
    %126 = vmatprep.subr.bf16.mxu0 0
    %127 = vmatpush1.bf16.msra.mxu0 0
    %128 = vmatprep.subr.bf16.mxu0 0
    %129 = vmatpush1.bf16.msra.mxu0 0
    %130 = vmatprep.subr.bf16.mxu0 0
    %131 = vmatpush1.bf16.msra.mxu0 0
    %132 = vmatprep.subr.bf16.mxu0 0
    %133 = vmatpush1.bf16.msra.mxu0 0
    %134 = vmatprep.subr.bf16.mxu0 0
    %135 = vmatpush1.bf16.msra.mxu0 0
    %136 = vmatprep.subr.bf16.mxu0 0
    %137 = vmatpush1.bf16.msra.mxu0 0
    %138 = vmatprep.subr.bf16.mxu0 0
    %139 = vmatpush1.bf16.msra.mxu0 0
    %140 = vmatprep.subr.bf16.mxu0 0
    %141 = vmatpush1.bf16.msra.mxu0 0
    %142 = vmatprep.subr.bf16.mxu0 0
    %143 = vmatpush1.bf16.msra.mxu0 0
    %144 = vmatprep.subr.bf16.mxu0 0
    %145 = vmatpush1.bf16.msra.mxu0 0
    %146 = vmatprep.subr.bf16.mxu0 0
    %147 = vmatpush1.bf16.msra.mxu0 0
    %148 = vmatprep.subr.bf16.mxu0 0
    %149 = vmatpush1.bf16.msra.mxu0 0
    %150 = vmatprep.subr.bf16.mxu0 0
    %151 = vmatpush1.bf16.msra.mxu0 0
    %152 = vmatprep.mubr.bf16.mxu0 0
    %153 = vmatmul.mubr.bf16.gmra.mrb[0].mxu0 %v118
    %v154 = vpop.f32.mrb[0].mxu0
    %v155 = vadd.f32 %v108, %v154
    %v156 = vpop.f32.mrb[0].mxu0
    %v157 = vpop.f32.mrb[0].mxu0
    %v158 = vpop.f32.mrb[0].mxu0
    %159 = vdwg.mxu0
    %v160 = vmul.f32 %v155, 0.01
    %v161 = vmax.f32 %v155, %v160
    %v162 = vpack.c.bf16 %v161, %v161
    %v163 = vld [vmem:[%s3] sm:$0xf]
    %v164 = vld [vmem:[%s3 + $0x4] sm:$0xf]
    %v165 = vld [vmem:[%s3 + $0x8] sm:$0xf]
    %v166 = vld [vmem:[%s3 + $0xc] sm:$0xf]
    %v167 = vld [vmem:[%s3 + $0x10] sm:$0xf]
    %v168 = vld [vmem:[%s3 + $0x14] sm:$0xf]
    %v169 = vld [vmem:[%s3 + $0x18] sm:$0xf]
    %v170 = vld [vmem:[%s3 + $0x1c] sm:$0xf]
    %v171 = vld [vmem:[%s3 + $0x20] sm:$0xf]
    %v172 = vld [vmem:[%s3 + $0x24] sm:$0xf]
    %v173 = vld [vmem:[%s3 + $0x28] sm:$0xf]
    %v174 = vld [vmem:[%s3 + $0x2c] sm:$0xf]
    %v175 = vld [vmem:[%s3 + $0x30] sm:$0xf]
    %v176 = vld [vmem:[%s3 + $0x34] sm:$0xf]
    %v177 = vld [vmem:[%s3 + $0x38] sm:$0xf]
    %v178 = vld [vmem:[%s3 + $0x3c] sm:$0xf]
    %v179 = vld [vmem:[%s4] sm:$0x1]
    %v181 = vlaneseq
    %v182 = vshrl.u32 %v181, 7
    %v183 = vsub.s32 0, %v182
    %v184 = vrot.slane %v179, %v183
    %v202 = vunpack.c.l.b16 %v163
    %v203 = vunpack.c.l.b16 %v164
    %v204 = vunpack.c.l.b16 %v165
    %v205 = vunpack.c.l.b16 %v166
    %v206 = vunpack.c.l.b16 %v167
    %v207 = vunpack.c.l.b16 %v168
    %v208 = vunpack.c.l.b16 %v169
    %v209 = vunpack.c.l.b16 %v170
    %v210 = vunpack.c.l.b16 %v171
    %v211 = vunpack.c.l.b16 %v172
    %v212 = vunpack.c.l.b16 %v173
    %v213 = vunpack.c.l.b16 %v174
    %v214 = vunpack.c.l.b16 %v175
    %v215 = vunpack.c.l.b16 %v176
    %v216 = vunpack.c.l.b16 %v177
    %v217 = vunpack.c.l.b16 %v178
    %v218 = vpack.c.b16 %v203, %v202
    %v219 = vpack.c.b16 %v205, %v204
    %v220 = vpack.c.b16 %v207, %v206
    %v221 = vpack.c.b16 %v209, %v208
    %v222 = vpack.c.b16 %v211, %v210
    %v223 = vpack.c.b16 %v213, %v212
    %v224 = vpack.c.b16 %v215, %v214
    %v225 = vpack.c.b16 %v217, %v216
    %234 = vmatprep.subr.bf16.mxu0 0
    %235 = vmatpush1.bf16.msra.mxu0 %v218
    %236 = vmatprep.subr.bf16.mxu0 0
    %237 = vmatpush1.bf16.msra.mxu0 %v219
    %238 = vmatprep.subr.bf16.mxu0 0
    %239 = vmatpush1.bf16.msra.mxu0 %v220
    %240 = vmatprep.subr.bf16.mxu0 0
    %241 = vmatpush1.bf16.msra.mxu0 %v221
    %242 = vmatprep.subr.bf16.mxu0 0
    %243 = vmatpush1.bf16.msra.mxu0 %v222
    %244 = vmatprep.subr.bf16.mxu0 0
    %245 = vmatpush1.bf16.msra.mxu0 %v223
    %246 = vmatprep.subr.bf16.mxu0 0
    %247 = vmatpush1.bf16.msra.mxu0 %v224
    %248 = vmatprep.subr.bf16.mxu0 0
    %249 = vmatpush1.bf16.msra.mxu0 %v225
    %250 = vmatprep.subr.bf16.mxu0 0
    %251 = vmatpush1.bf16.msra.mxu0 0
    %252 = vmatprep.subr.bf16.mxu0 0
    %253 = vmatpush1.bf16.msra.mxu0 0
    %254 = vmatprep.subr.bf16.mxu0 0
    %255 = vmatpush1.bf16.msra.mxu0 0
    %256 = vmatprep.subr.bf16.mxu0 0
    %257 = vmatpush1.bf16.msra.mxu0 0
    %258 = vmatprep.subr.bf16.mxu0 0
    %259 = vmatpush1.bf16.msra.mxu0 0
    %260 = vmatprep.subr.bf16.mxu0 0
    %261 = vmatpush1.bf16.msra.mxu0 0
    %262 = vmatprep.subr.bf16.mxu0 0
    %263 = vmatpush1.bf16.msra.mxu0 0
    %264 = vmatprep.subr.bf16.mxu0 0
    %265 = vmatpush1.bf16.msra.mxu0 0
    %266 = vmatprep.mubr.bf16.mxu0 0
    %267 = vmatmul.mubr.bf16.gmra.mrb[0].mxu0 %v162
    %v268 = vpop.f32.mrb[0].mxu0
    %v269 = vadd.f32 %v184, %v268
    %v270 = vpop.f32.mrb[0].mxu0
    %v271 = vpop.f32.mrb[0].mxu0
    %v272 = vpop.f32.mrb[0].mxu0
    %273 = vdwg.mxu0
    %v274 = vmul.f32 %v269, 0.01
    %v275 = vmax.f32 %v269, %v274
    %v276 = vpack.c.bf16 %v275, %v275
    %v277 = vld [vmem:[#allocation4] sm:$0xf]
    %v278 = vld [vmem:[#allocation4 + $0x4] sm:$0xf]
    %v279 = vld [vmem:[#allocation4 + $0x8] sm:$0xf]
    %v280 = vld [vmem:[#allocation4 + $0xc] sm:$0xf]
    %v281 = vld [vmem:[#allocation4 + $0x10] sm:$0xf]
    %v282 = vld [vmem:[#allocation4 + $0x14] sm:$0xf]
    %v283 = vld [vmem:[#allocation4 + $0x18] sm:$0xf]
    %v284 = vld [vmem:[#allocation4 + $0x1c] sm:$0xf]
    %v285 = vld [vmem:[#allocation4 + $0x20] sm:$0xf]
    %v286 = vld [vmem:[#allocation4 + $0x24] sm:$0xf]
    %v287 = vld [vmem:[#allocation4 + $0x28] sm:$0xf]
    %v288 = vld [vmem:[#allocation4 + $0x2c] sm:$0xf]
    %v289 = vld [vmem:[#allocation4 + $0x30] sm:$0xf]
    %v290 = vld [vmem:[#allocation4 + $0x34] sm:$0xf]
    %v291 = vld [vmem:[#allocation4 + $0x38] sm:$0xf]
    %v292 = vld [vmem:[#allocation4 + $0x3c] sm:$0xf]
    %v293 = vld [vmem:[%s6] sm:$0x1]
    %v295 = vlaneseq
    %v296 = vshrl.u32 %v295, 7
    %v297 = vsub.s32 0, %v296
    %v298 = vrot.slane %v293, %v297
    %v316 = vunpack.c.l.b16 %v277
    %v317 = vunpack.c.l.b16 %v278
    %v318 = vunpack.c.l.b16 %v279
    %v319 = vunpack.c.l.b16 %v280
    %v320 = vunpack.c.l.b16 %v281
    %v321 = vunpack.c.l.b16 %v282
    %v322 = vunpack.c.l.b16 %v283
    %v323 = vunpack.c.l.b16 %v284
    %v324 = vunpack.c.l.b16 %v285
    %v325 = vunpack.c.l.b16 %v286
    %v326 = vunpack.c.l.b16 %v287
    %v327 = vunpack.c.l.b16 %v288
    %v328 = vunpack.c.l.b16 %v289
    %v329 = vunpack.c.l.b16 %v290
    %v330 = vunpack.c.l.b16 %v291
    %v331 = vunpack.c.l.b16 %v292
    %v332 = vpack.c.b16 %v317, %v316
    %v333 = vpack.c.b16 %v319, %v318
    %v334 = vpack.c.b16 %v321, %v320
    %v335 = vpack.c.b16 %v323, %v322
    %v336 = vpack.c.b16 %v325, %v324
    %v337 = vpack.c.b16 %v327, %v326
    %v338 = vpack.c.b16 %v329, %v328
    %v339 = vpack.c.b16 %v331, %v330
    %348 = vmatprep.subr.bf16.mxu0 0
    %349 = vmatpush1.bf16.msra.mxu0 %v332
    %350 = vmatprep.subr.bf16.mxu0 0
    %351 = vmatpush1.bf16.msra.mxu0 %v333
    %352 = vmatprep.subr.bf16.mxu0 0
    %353 = vmatpush1.bf16.msra.mxu0 %v334
    %354 = vmatprep.subr.bf16.mxu0 0
    %355 = vmatpush1.bf16.msra.mxu0 %v335
    %356 = vmatprep.subr.bf16.mxu0 0
    %357 = vmatpush1.bf16.msra.mxu0 %v336
    %358 = vmatprep.subr.bf16.mxu0 0
    %359 = vmatpush1.bf16.msra.mxu0 %v337
    %360 = vmatprep.subr.bf16.mxu0 0
    %361 = vmatpush1.bf16.msra.mxu0 %v338
    %362 = vmatprep.subr.bf16.mxu0 0
    %363 = vmatpush1.bf16.msra.mxu0 %v339
    %364 = vmatprep.subr.bf16.mxu0 0
    %365 = vmatpush1.bf16.msra.mxu0 0
    %366 = vmatprep.subr.bf16.mxu0 0
    %367 = vmatpush1.bf16.msra.mxu0 0
    %368 = vmatprep.subr.bf16.mxu0 0
    %369 = vmatpush1.bf16.msra.mxu0 0
    %370 = vmatprep.subr.bf16.mxu0 0
    %371 = vmatpush1.bf16.msra.mxu0 0
    %372 = vmatprep.subr.bf16.mxu0 0
    %373 = vmatpush1.bf16.msra.mxu0 0
    %374 = vmatprep.subr.bf16.mxu0 0
    %375 = vmatpush1.bf16.msra.mxu0 0
    %376 = vmatprep.subr.bf16.mxu0 0
    %377 = vmatpush1.bf16.msra.mxu0 0
    %378 = vmatprep.subr.bf16.mxu0 0
    %379 = vmatpush1.bf16.msra.mxu0 0
    %380 = vmatprep.mubr.bf16.mxu0 0
    %381 = vmatmul.mubr.bf16.gmra.mrb[0].mxu0 %v276
    %v382 = vpop.f32.mrb[0].mxu0
    %v383 = vadd.f32 %v298, %v382
    %v384 = vpop.f32.mrb[0].mxu0
    %v385 = vpop.f32.mrb[0].mxu0
    %v386 = vpop.f32.mrb[0].mxu0
    %387 = vdwg.mxu0
    %v388 = vmul.f32 %v383, 0.01
    %v389 = vmax.f32 %v383, %v388
    %v390 = vpack.c.bf16 %v389, %v389
    %v391 = vld [vmem:[#allocation6] sm:$0xf]
    %v392 = vld [vmem:[#allocation6 + $0x4] sm:$0xf]
    %v393 = vld [vmem:[#allocation6 + $0x8] sm:$0xf]
    %v394 = vld [vmem:[#allocation6 + $0xc] sm:$0xf]
    %v395 = vld [vmem:[#allocation6 + $0x10] sm:$0xf]
    %v396 = vld [vmem:[#allocation6 + $0x14] sm:$0xf]
    %v397 = vld [vmem:[#allocation6 + $0x18] sm:$0xf]
    %v398 = vld [vmem:[#allocation6 + $0x1c] sm:$0xf]
    %v399 = vld [vmem:[#allocation6 + $0x20] sm:$0xf]
    %v400 = vld [vmem:[#allocation6 + $0x24] sm:$0xf]
    %v401 = vld [vmem:[#allocation6 + $0x28] sm:$0xf]
    %v402 = vld [vmem:[#allocation6 + $0x2c] sm:$0xf]
    %v403 = vld [vmem:[#allocation6 + $0x30] sm:$0xf]
    %v404 = vld [vmem:[#allocation6 + $0x34] sm:$0xf]
    %v405 = vld [vmem:[#allocation6 + $0x38] sm:$0xf]
    %v406 = vld [vmem:[#allocation6 + $0x3c] sm:$0xf]
    %v407 = vld [vmem:[%s8] sm:$0x1]
    %v409 = vlaneseq
    %v410 = vshrl.u32 %v409, 7
    %v411 = vsub.s32 0, %v410
    %v412 = vrot.slane %v407, %v411
    %v430 = vunpack.c.l.b16 %v391
    %v431 = vunpack.c.l.b16 %v392
    %v432 = vunpack.c.l.b16 %v393
    %v433 = vunpack.c.l.b16 %v394
    %v434 = vunpack.c.l.b16 %v395
    %v435 = vunpack.c.l.b16 %v396
    %v436 = vunpack.c.l.b16 %v397
    %v437 = vunpack.c.l.b16 %v398
    %v438 = vunpack.c.l.b16 %v399
    %v439 = vunpack.c.l.b16 %v400
    %v440 = vunpack.c.l.b16 %v401
    %v441 = vunpack.c.l.b16 %v402
    %v442 = vunpack.c.l.b16 %v403
    %v443 = vunpack.c.l.b16 %v404
    %v444 = vunpack.c.l.b16 %v405
    %v445 = vunpack.c.l.b16 %v406
    %v446 = vpack.c.b16 %v431, %v430
    %v447 = vpack.c.b16 %v433, %v432
    %v448 = vpack.c.b16 %v435, %v434
    %v449 = vpack.c.b16 %v437, %v436
    %v450 = vpack.c.b16 %v439, %v438
    %v451 = vpack.c.b16 %v441, %v440
    %v452 = vpack.c.b16 %v443, %v442
    %v453 = vpack.c.b16 %v445, %v444
    %462 = vmatprep.subr.bf16.mxu0 0
    %463 = vmatpush1.bf16.msra.mxu0 %v446
    %464 = vmatprep.subr.bf16.mxu0 0
    %465 = vmatpush1.bf16.msra.mxu0 %v447
    %466 = vmatprep.subr.bf16.mxu0 0
    %467 = vmatpush1.bf16.msra.mxu0 %v448
    %468 = vmatprep.subr.bf16.mxu0 0
    %469 = vmatpush1.bf16.msra.mxu0 %v449
    %470 = vmatprep.subr.bf16.mxu0 0
    %471 = vmatpush1.bf16.msra.mxu0 %v450
    %472 = vmatprep.subr.bf16.mxu0 0
    %473 = vmatpush1.bf16.msra.mxu0 %v451
    %474 = vmatprep.subr.bf16.mxu0 0
    %475 = vmatpush1.bf16.msra.mxu0 %v452
    %476 = vmatprep.subr.bf16.mxu0 0
    %477 = vmatpush1.bf16.msra.mxu0 %v453
    %478 = vmatprep.subr.bf16.mxu0 0
    %479 = vmatpush1.bf16.msra.mxu0 0
    %480 = vmatprep.subr.bf16.mxu0 0
    %481 = vmatpush1.bf16.msra.mxu0 0
    %482 = vmatprep.subr.bf16.mxu0 0
    %483 = vmatpush1.bf16.msra.mxu0 0
    %484 = vmatprep.subr.bf16.mxu0 0
    %485 = vmatpush1.bf16.msra.mxu0 0
    %486 = vmatprep.subr.bf16.mxu0 0
    %487 = vmatpush1.bf16.msra.mxu0 0
    %488 = vmatprep.subr.bf16.mxu0 0
    %489 = vmatpush1.bf16.msra.mxu0 0
    %490 = vmatprep.subr.bf16.mxu0 0
    %491 = vmatpush1.bf16.msra.mxu0 0
    %492 = vmatprep.subr.bf16.mxu0 0
    %493 = vmatpush1.bf16.msra.mxu0 0
    %494 = vmatprep.mubr.bf16.mxu0 0
    %495 = vmatmul.mubr.bf16.gmra.mrb[0].mxu0 %v390
    %v496 = vpop.f32.mrb[0].mxu0
    %v497 = vadd.f32 %v412, %v496
    %v498 = vpop.f32.mrb[0].mxu0
    %v499 = vpop.f32.mrb[0].mxu0
    %v500 = vpop.f32.mrb[0].mxu0
    %501 = vdwg.mxu0
    %v502 = vmul.f32 %v497, 0.01
    %v503 = vmax.f32 %v497, %v502
    %v504 = vpack.c.bf16 %v503, %v503
    %v505 = vld [vmem:[#allocation7] sm:$0xf]
    %v506 = vld [vmem:[#allocation7 + $0x4] sm:$0xf]
    %v507 = vld [vmem:[#allocation7 + $0x8] sm:$0xf]
    %v508 = vld [vmem:[#allocation7 + $0xc] sm:$0xf]
    %v509 = vld [vmem:[#allocation7 + $0x10] sm:$0xf]
    %v510 = vld [vmem:[#allocation7 + $0x14] sm:$0xf]
    %v511 = vld [vmem:[#allocation7 + $0x18] sm:$0xf]
    %v512 = vld [vmem:[#allocation7 + $0x1c] sm:$0xf]
    %v513 = vld [vmem:[#allocation7 + $0x20] sm:$0xf]
    %v514 = vld [vmem:[#allocation7 + $0x24] sm:$0xf]
    %v515 = vld [vmem:[#allocation7 + $0x28] sm:$0xf]
    %v516 = vld [vmem:[#allocation7 + $0x2c] sm:$0xf]
    %v517 = vld [vmem:[#allocation7 + $0x30] sm:$0xf]
    %v518 = vld [vmem:[#allocation7 + $0x34] sm:$0xf]
    %v519 = vld [vmem:[#allocation7 + $0x38] sm:$0xf]
    %v520 = vld [vmem:[#allocation7 + $0x3c] sm:$0xf]
    %v521 = vld [vmem:[%s10] sm:$0x1]
    %v523 = vlaneseq
    %v524 = vshrl.u32 %v523, 7
    %v525 = vsub.s32 0, %v524
    %v526 = vrot.slane %v521, %v525
    %v544 = vunpack.c.l.b16 %v505
    %v545 = vunpack.c.l.b16 %v506
    %v546 = vunpack.c.l.b16 %v507
    %v547 = vunpack.c.l.b16 %v508
    %v548 = vunpack.c.l.b16 %v509
    %v549 = vunpack.c.l.b16 %v510
    %v550 = vunpack.c.l.b16 %v511
    %v551 = vunpack.c.l.b16 %v512
    %v552 = vunpack.c.l.b16 %v513
    %v553 = vunpack.c.l.b16 %v514
    %v554 = vunpack.c.l.b16 %v515
    %v555 = vunpack.c.l.b16 %v516
    %v556 = vunpack.c.l.b16 %v517
    %v557 = vunpack.c.l.b16 %v518
    %v558 = vunpack.c.l.b16 %v519
    %v559 = vunpack.c.l.b16 %v520
    %v560 = vpack.c.b16 %v545, %v544
    %v561 = vpack.c.b16 %v547, %v546
    %v562 = vpack.c.b16 %v549, %v548
    %v563 = vpack.c.b16 %v551, %v550
    %v564 = vpack.c.b16 %v553, %v552
    %v565 = vpack.c.b16 %v555, %v554
    %v566 = vpack.c.b16 %v557, %v556
    %v567 = vpack.c.b16 %v559, %v558
    %576 = vmatprep.subr.bf16.mxu0 0
    %577 = vmatpush1.bf16.msra.mxu0 %v560
    %578 = vmatprep.subr.bf16.mxu0 0
    %579 = vmatpush1.bf16.msra.mxu0 %v561
    %580 = vmatprep.subr.bf16.mxu0 0
    %581 = vmatpush1.bf16.msra.mxu0 %v562
    %582 = vmatprep.subr.bf16.mxu0 0
    %583 = vmatpush1.bf16.msra.mxu0 %v563
    %584 = vmatprep.subr.bf16.mxu0 0
    %585 = vmatpush1.bf16.msra.mxu0 %v564
    %586 = vmatprep.subr.bf16.mxu0 0
    %587 = vmatpush1.bf16.msra.mxu0 %v565
    %588 = vmatprep.subr.bf16.mxu0 0
    %589 = vmatpush1.bf16.msra.mxu0 %v566
    %590 = vmatprep.subr.bf16.mxu0 0
    %591 = vmatpush1.bf16.msra.mxu0 %v567
    %592 = vmatprep.subr.bf16.mxu0 0
    %593 = vmatpush1.bf16.msra.mxu0 0
    %594 = vmatprep.subr.bf16.mxu0 0
    %595 = vmatpush1.bf16.msra.mxu0 0
    %596 = vmatprep.subr.bf16.mxu0 0
    %597 = vmatpush1.bf16.msra.mxu0 0
    %598 = vmatprep.subr.bf16.mxu0 0
    %599 = vmatpush1.bf16.msra.mxu0 0
    %600 = vmatprep.subr.bf16.mxu0 0
    %601 = vmatpush1.bf16.msra.mxu0 0
    %602 = vmatprep.subr.bf16.mxu0 0
    %603 = vmatpush1.bf16.msra.mxu0 0
    %604 = vmatprep.subr.bf16.mxu0 0
    %605 = vmatpush1.bf16.msra.mxu0 0
    %606 = vmatprep.subr.bf16.mxu0 0
    %607 = vmatpush1.bf16.msra.mxu0 0
    %608 = vmatprep.mubr.bf16.mxu0 0
    %609 = vmatmul.mubr.bf16.gmra.mrb[0].mxu0 %v504
    %v610 = vpop.f32.mrb[0].mxu0
    %v611 = vadd.f32 %v526, %v610
    %v612 = vpop.f32.mrb[0].mxu0
    %v613 = vpop.f32.mrb[0].mxu0
    %v614 = vpop.f32.mrb[0].mxu0
    %615 = vdwg.mxu0
    %v616 = vmul.f32 %v611, 0.01
    %v617 = vmax.f32 %v611, %v616
    %v618 = vpack.c.bf16 %v617, %v617
    %v619 = vld [vmem:[%s11] sm:$0xf]
    %v620 = vld [vmem:[%s12] sm:$0xff]
    %622 = vset.pattern.permute.xlu0 0
    %623 = vperm.xlu0 %622, %v620
    %v624 = vpop.permute.xlu0 %623
    %626 = vmatprep.subr.bf16.mxu0 0
    %627 = vmatpush1.bf16.xpose.msra.mxu0 %v618
    %628 = vmatprep.subr.bf16.mxu0 0
    %629 = vmatpush1.bf16.xpose.msra.mxu0 0
    %630 = vmatprep.subr.bf16.mxu0 0
    %631 = vmatpush1.bf16.xpose.msra.mxu0 0
    %632 = vmatprep.subr.bf16.mxu0 0
    %633 = vmatpush1.bf16.xpose.msra.mxu0 0
    %634 = vmatprep.subr.bf16.mxu0 0
    %635 = vmatpush1.bf16.xpose.msra.mxu0 0
    %636 = vmatprep.subr.bf16.mxu0 0
    %637 = vmatpush1.bf16.xpose.msra.mxu0 0
    %638 = vmatprep.subr.bf16.mxu0 0
    %639 = vmatpush1.bf16.xpose.msra.mxu0 0
    %640 = vmatprep.subr.bf16.mxu0 0
    %641 = vmatpush1.bf16.xpose.msra.mxu0 0
    %642 = vmatprep.subr.bf16.mxu0 0
    %643 = vmatpush1.bf16.xpose.msra.mxu0 0
    %644 = vmatprep.subr.bf16.mxu0 0
    %645 = vmatpush1.bf16.xpose.msra.mxu0 0
    %646 = vmatprep.subr.bf16.mxu0 0
    %647 = vmatpush1.bf16.xpose.msra.mxu0 0
    %648 = vmatprep.subr.bf16.mxu0 0
    %649 = vmatpush1.bf16.xpose.msra.mxu0 0
    %650 = vmatprep.subr.bf16.mxu0 0
    %651 = vmatpush1.bf16.xpose.msra.mxu0 0
    %652 = vmatprep.subr.bf16.mxu0 0
    %653 = vmatpush1.bf16.xpose.msra.mxu0 0
    %654 = vmatprep.subr.bf16.mxu0 0
    %655 = vmatpush1.bf16.xpose.msra.mxu0 0
    %656 = vmatprep.subr.bf16.mxu0 0
    %657 = vmatpush1.bf16.xpose.msra.mxu0 0
    %658 = vmatprep.mubr.bf16.mxu0 0
    %659 = vmatmul.mubr.bf16.gmra.mrb[0].mxu0 %v619
    %v660 = vpop.f32.mrb[0].mxu0
    %v661 = vadd.f32 %v624, %v660
    %v662 = vpop.f32.mrb[0].mxu0
    %v663 = vpop.f32.mrb[0].mxu0
    %v664 = vpop.f32.mrb[0].mxu0
    %665 = vdwg.mxu0
    %vm666 = vcmask 64512
    %667 = vst.msk [vmem:[%s13] sm:$0xff] %vm666, %v661
    // Predicated region
    $region70: #{flow_matching_forward.1} parent=1 // pred_check
      _
    $region71: #{flow_matching_forward.1} parent=1 // pred_check_branch
      %669 = sbr.rel (0) target = $region73
    $region72: #{flow_matching_forward.1} parent=1 // pred_region
      _
    $region73: #{flow_matching_forward.1} parent=1 // pred_fallthru
      _
    // Predicated region
    $region74: #{flow_matching_forward.1} parent=1 // pred_check
      _
    $region75: #{flow_matching_forward.1} parent=1 // pred_check_branch
      %671 = sbr.rel (0) target = $region77
    $region76: #{flow_matching_forward.1} parent=1 // pred_region
      _
    $region77: #{flow_matching_forward.1} parent=1 // pred_fallthru
      _
    %672 = vsyncpa [#allocation3], 1
    %673 = vsyncpa [#allocation5], 1
    %674 = vsyncpa [#allocation8], 1

</llo_original>
